<compile_context>
chip_gen: v7x
topology: tpu7x:2x2x1
jax: 0.10.0
libtpu: 0.0.40
codegen_flags: <defaults>
</compile_context>

<pallas_src>
import functools
import math

import jax
import jax.numpy as jnp
from jax.experimental import pallas as pl
from jax.experimental.pallas import tpu as pltpu


def _round_up(x, m):
    return ((x + m - 1) // m) * m


def _vmem_ceiling_bytes():
    """Per-generation VMEM ceiling with headroom for compiler scratch."""
    cap = 64 * 1024 * 1024  # conservative fallback (v7x physical VMEM)
    try:
        info = pltpu.get_tpu_info()
        cap = int(getattr(info, "vmem_capacity_bytes", cap))
    except Exception:
        pass
    # Leave ~25% headroom: ~48 MiB on v7x (64 MiB), ~96 MiB on v5e/v6e (128 MiB).
    return max(int(cap * 3 // 4), 16 * 1024 * 1024)


def _mlp_kernel(num_layers, x_ref, *refs):
    # refs = (w_0..w_{L-1}, b_0..b_{L-1}, o_ref)
    w_refs = refs[:num_layers]
    b_refs = refs[num_layers: 2 * num_layers]
    o_ref = refs[2 * num_layers]

    h = x_ref[...]                                   # native dtype -> MXU
    for i in range(num_layers):
        acc = jnp.dot(h, w_refs[i][...],
                      preferred_element_type=jnp.float32)   # f32 accumulate
        acc = acc + b_refs[i][...]                   # (1, out) f32 broadcast
        if i < num_layers - 1:
            # ReLU in f32, then back to the input dtype so the next matmul
            # runs at native MXU rate (no-op for f32 inputs).
            h = jnp.maximum(acc, 0.0).astype(x_ref.dtype)
        else:
            h = acc
    o_ref[...] = h.astype(o_ref.dtype)


def mlp_forward(x, weights, biases, *, tile_m=512, compute_dtype=None):
    """x: (N, input_dim); weights[i]: (in_i, out_i); biases[i]: (1, out_i)."""
    num_layers = len(weights)
    n_rows, in_dim = x.shape
    out_dim = weights[-1].shape[1]
    out_dtype = x.dtype
    dims = [in_dim] + [w.shape[1] for w in weights]          # logical feature dims

    # Optional reduced-precision operands (memory-bound kernel -> halves HBM
    # traffic); accumulation stays f32 in-kernel.
    if compute_dtype is not None:
        x = x.astype(compute_dtype)
        weights = [w.astype(compute_dtype) for w in weights]

    dtype = x.dtype
    itemsize = jnp.dtype(dtype).itemsize

    # ---- adaptive row tiling: minimal tail waste, >=2 grid steps when we can
    # (so ("parallel",) can shard across v7x's two TensorCores) ---------------
    n_tiles = max(1, pl.cdiv(n_rows, tile_m))
    if n_tiles == 1 and n_rows > 8:
        n_tiles = 2
    tm = _round_up(pl.cdiv(n_rows, n_tiles), 8)
    padded_rows = tm * n_tiles
    grid = (n_tiles,)

    # Only the row dim is ever padded (with zeros); feature dims stay unpadded.
    x_p = x
    if padded_rows != n_rows:
        x_p = jnp.zeros((padded_rows, in_dim), dtype).at[:n_rows, :].set(x)

    # ---- BlockSpecs (full-width feature dims => legal, contiguous DMAs) -----
    in_specs = [pl.BlockSpec((tm, in_dim), lambda i: (i, 0))]
    for w in weights:   # resident blocks (constant index map)
        in_specs.append(pl.BlockSpec(w.shape, lambda i: (0, 0)))
    for b in biases:
        in_specs.append(pl.BlockSpec(b.shape, lambda i: (0, 0)))
    out_spec = pl.BlockSpec((tm, out_dim), lambda i: (i, 0))
    # TODO(synk): single-buffer the resident weight blocks (pipeline_mode=
    # pl.Buffered(1)) once pipeline_mode is reliably honored by top-level
    # pallas_call on this jax version; matters for DETR-scale hidden dims on v7x.

    # ---- VMEM budget (double-buffered x/out tiles + resident weights) -------
    w_bytes = sum(w.size * jnp.dtype(w.dtype).itemsize for w in weights)
    b_bytes = sum(b.size * jnp.dtype(b.dtype).itemsize for b in biases)
    vmem_need = 2 * tm * (in_dim + out_dim) * itemsize       # x/out tiles (x2 buffers)
    vmem_need += 2 * (w_bytes + b_bytes)                     # resident (compiler 2-buffers)
    vmem_need += 4 * tm * max(dims) * 4                      # f32 intermediate headroom
    vmem_limit = int(min(max(vmem_need, 16 * 1024 * 1024), _vmem_ceiling_bytes()))

    # ---- cost hint for XLA (actual kernel traffic / work) -------------------
    flops = 2 * padded_rows * sum(a * b for a, b in zip(dims[:-1], dims[1:]))
    bytes_accessed = (padded_rows * in_dim * itemsize
                      + padded_rows * out_dim * itemsize
                      + w_bytes + b_bytes)
    cost = pl.CostEstimate(flops=flops, transcendentals=0,
                           bytes_accessed=bytes_accessed)

    out_padded = pl.pallas_call(
        functools.partial(_mlp_kernel, num_layers),
        out_shape=jax.ShapeDtypeStruct((padded_rows, out_dim), out_dtype),
        grid_spec=pltpu.PrefetchScalarGridSpec(
            num_scalar_prefetch=0,
            grid=grid,
            in_specs=in_specs,
            out_specs=out_spec,
        ),
        compiler_params=pltpu.CompilerParams(
            dimension_semantics=("parallel",),
            vmem_limit_bytes=vmem_limit,
        ),
        cost_estimate=cost,
    )(x_p, *weights, *biases)

    if padded_rows != n_rows:
        out_padded = out_padded[:n_rows]
    return out_padded


def init_mlp_params(key, input_dim, hidden_dim, output_dim, num_layers):
    """Deterministic init matching nn.Linear's default U(-1/sqrt(in), 1/sqrt(in))."""
    h = [hidden_dim] * (num_layers - 1)
    dims_in = [input_dim] + h
    dims_out = h + [output_dim]
    weights, biases = [], []
    for n, k in zip(dims_in, dims_out):
        key, kw, kb = jax.random.split(key, 3)
        bound = 1.0 / math.sqrt(n)
        # stored as (in, out) = transpose of PyTorch's (out, in)
        weights.append(
            jax.random.uniform(kw, (n, k), jnp.float32, minval=-bound, maxval=bound)
        )
        biases.append(
            jax.random.uniform(kb, (1, k), jnp.float32, minval=-bound, maxval=bound)
        )
    return weights, biases


def mlp_reference(x, weights, biases):
    """Pure-JAX reference of the PyTorch forward."""
    h = x
    for i, (w, b) in enumerate(zip(weights, biases)):
        h = h @ w + b
        if i < len(weights) - 1:
            h = jnp.maximum(h, 0.0)
    return h


if __name__ == "__main__":
    key = jax.random.PRNGKey(0)
    key, kx1, kx2 = jax.random.split(key, 3)

    # Shapes consistent with MLP(input_dim=32, hidden_dim=64, output_dim=16, num_layers=3)
    input_dim, hidden_dim, output_dim, num_layers = 32, 64, 16, 3
    weights, biases = init_mlp_params(key, input_dim, hidden_dim, output_dim, num_layers)

    # Case 1: small, e.g. flattened (batch=2, queries=8) -> 16 rows
    n_rows = 16
    x = jax.random.normal(kx1, (n_rows, input_dim), jnp.float32)
    out = jax.block_until_ready(mlp_forward(x, weights, biases))
    ref = mlp_reference(x, weights, biases)
    assert out.shape == (n_rows, output_dim)
    assert jnp.allclose(out, ref, atol=1e-4, rtol=1e-4), "mismatch vs reference (case 1)"

    # Case 2: row count not divisible by 8 / tile (exercises adaptive tiling + row padding)
    n_rows2 = 300
    x2 = jax.random.normal(kx2, (n_rows2, input_dim), jnp.float32)
    out2 = jax.block_until_ready(mlp_forward(x2, weights, biases, tile_m=512))
    ref2 = mlp_reference(x2, weights, biases)
    assert out2.shape == (n_rows2, output_dim)
    assert jnp.allclose(out2, ref2, atol=1e-4, rtol=1e-4), "mismatch vs reference (case 2)"

    print("KERNEL_OK")
</pallas_src>

<mosaic_0001>
module attributes {stable_mosaic.version = 11 : i64} {
  func.func @_mlp_kernel(%arg0: i32, %arg1: memref<8x32xf32, #tpu.memory_space<vmem>>, %arg2: memref<32x64xf32, #tpu.memory_space<vmem>>, %arg3: memref<64x64xf32, #tpu.memory_space<vmem>>, %arg4: memref<64x16xf32, #tpu.memory_space<vmem>>, %arg5: memref<1x64xf32, #tpu.memory_space<vmem>>, %arg6: memref<1x64xf32, #tpu.memory_space<vmem>>, %arg7: memref<1x16xf32, #tpu.memory_space<vmem>>, %arg8: memref<8x16xf32, #tpu.memory_space<vmem>>) attributes {dimension_semantics = [#tpu.dimension_semantics<parallel>], iteration_bounds = array<i64: 2>, scalar_prefetch = 0 : i64, scratch_operands = 0 : i64, tpu.core_type = #tpu.core_type<tc>, window_params = [{transform_indices = @transform_0, window_bounds = array<i64: 8, 32>}, {pipeline_mode = #tpu.pipeline_mode<synchronous>, transform_indices = @transform_1, window_bounds = array<i64: 32, 64>}, {pipeline_mode = #tpu.pipeline_mode<synchronous>, transform_indices = @transform_2, window_bounds = array<i64: 64, 64>}, {pipeline_mode = #tpu.pipeline_mode<synchronous>, transform_indices = @transform_3, window_bounds = array<i64: 64, 16>}, {pipeline_mode = #tpu.pipeline_mode<synchronous>, transform_indices = @transform_4, window_bounds = array<i64: 1, 64>}, {pipeline_mode = #tpu.pipeline_mode<synchronous>, transform_indices = @transform_5, window_bounds = array<i64: 1, 64>}, {pipeline_mode = #tpu.pipeline_mode<synchronous>, transform_indices = @transform_6, window_bounds = array<i64: 1, 16>}, {transform_indices = @transform_7, window_bounds = array<i64: 8, 16>}]} {
    %c0 = arith.constant 0 : index
    %c0_0 = arith.constant 0 : index
    %0 = vector.load %arg1[%c0, %c0_0] : memref<8x32xf32, #tpu.memory_space<vmem>>, vector<8x32xf32>
    %c0_1 = arith.constant 0 : index
    %c0_2 = arith.constant 0 : index
    %1 = vector.load %arg2[%c0_1, %c0_2] : memref<32x64xf32, #tpu.memory_space<vmem>>, vector<32x64xf32>
    %cst = arith.constant dense<0.000000e+00> : vector<8x64xf32>
    %2 = tpu.matmul %0, %1, %cst {dimension_numbers = #tpu.dot_dimension_numbers<[1], [0], [0], [1], [0, 0, 1, 1], [], []>} : vector<8x32xf32>, vector<32x64xf32>, vector<8x64xf32> -> vector<8x64xf32>
    %c0_3 = arith.constant 0 : index
    %c0_4 = arith.constant 0 : index
    %3 = vector.load %arg5[%c0_3, %c0_4] : memref<1x64xf32, #tpu.memory_space<vmem>>, vector<1x64xf32>
    %4 = vector.broadcast %3 : vector<1x64xf32> to vector<8x64xf32>
    %5 = arith.addf %2, %4 : vector<8x64xf32>
    %cst_5 = arith.constant 0.000000e+00 : f32
    %6 = vector.broadcast %cst_5 : f32 to vector<8x64xf32>
    %7 = arith.maximumf %5, %6 : vector<8x64xf32>
    %c0_6 = arith.constant 0 : index
    %c0_7 = arith.constant 0 : index
    %8 = vector.load %arg3[%c0_6, %c0_7] : memref<64x64xf32, #tpu.memory_space<vmem>>, vector<64x64xf32>
    %cst_8 = arith.constant dense<0.000000e+00> : vector<8x64xf32>
    %9 = tpu.matmul %7, %8, %cst_8 {dimension_numbers = #tpu.dot_dimension_numbers<[1], [0], [0], [1], [0, 0, 1, 1], [], []>} : vector<8x64xf32>, vector<64x64xf32>, vector<8x64xf32> -> vector<8x64xf32>
    %c0_9 = arith.constant 0 : index
    %c0_10 = arith.constant 0 : index
    %10 = vector.load %arg6[%c0_9, %c0_10] : memref<1x64xf32, #tpu.memory_space<vmem>>, vector<1x64xf32>
    %11 = vector.broadcast %10 : vector<1x64xf32> to vector<8x64xf32>
    %12 = arith.addf %9, %11 : vector<8x64xf32>
    %cst_11 = arith.constant 0.000000e+00 : f32
    %13 = vector.broadcast %cst_11 : f32 to vector<8x64xf32>
    %14 = arith.maximumf %12, %13 : vector<8x64xf32>
    %c0_12 = arith.constant 0 : index
    %c0_13 = arith.constant 0 : index
    %15 = vector.load %arg4[%c0_12, %c0_13] : memref<64x16xf32, #tpu.memory_space<vmem>>, vector<64x16xf32>
    %cst_14 = arith.constant dense<0.000000e+00> : vector<8x16xf32>
    %16 = tpu.matmul %14, %15, %cst_14 {dimension_numbers = #tpu.dot_dimension_numbers<[1], [0], [0], [1], [0, 0, 1, 1], [], []>} : vector<8x64xf32>, vector<64x16xf32>, vector<8x16xf32> -> vector<8x16xf32>
    %c0_15 = arith.constant 0 : index
    %c0_16 = arith.constant 0 : index
    %17 = vector.load %arg7[%c0_15, %c0_16] : memref<1x16xf32, #tpu.memory_space<vmem>>, vector<1x16xf32>
    %18 = vector.broadcast %17 : vector<1x16xf32> to vector<8x16xf32>
    %19 = arith.addf %16, %18 : vector<8x16xf32>
    %c0_17 = arith.constant 0 : index
    %c0_18 = arith.constant 0 : index
    %20 = vector.load %arg8[%c0_17, %c0_18] : memref<8x16xf32, #tpu.memory_space<vmem>>, vector<8x16xf32>
    tpu.vector_store %arg8[%c0_17, %c0_18], %19 {strides = array<i32>} : memref<8x16xf32, #tpu.memory_space<vmem>>, vector<8x16xf32>,
    return
  }
  func.func @transform_0(%arg0: i32) -> (i32, i32) {
    %c0_i32 = arith.constant 0 : i32
    %c0_i32_0 = arith.constant 0 : i32
    return %arg0, %c0_i32 : i32, i32
  }
  func.func @transform_1(%arg0: i32) -> (i32, i32) {
    %c0_i32 = arith.constant 0 : i32
    %c0_i32_0 = arith.constant 0 : i32
    %c0_i32_1 = arith.constant 0 : i32
    return %c0_i32, %c0_i32_0 : i32, i32
  }
  func.func @transform_2(%arg0: i32) -> (i32, i32) {
    %c0_i32 = arith.constant 0 : i32
    %c0_i32_0 = arith.constant 0 : i32
    %c0_i32_1 = arith.constant 0 : i32
    return %c0_i32, %c0_i32_0 : i32, i32
  }
  func.func @transform_3(%arg0: i32) -> (i32, i32) {
    %c0_i32 = arith.constant 0 : i32
    %c0_i32_0 = arith.constant 0 : i32
    %c0_i32_1 = arith.constant 0 : i32
    return %c0_i32, %c0_i32_0 : i32, i32
  }
  func.func @transform_4(%arg0: i32) -> (i32, i32) {
    %c0_i32 = arith.constant 0 : i32
    %c0_i32_0 = arith.constant 0 : i32
    %c0_i32_1 = arith.constant 0 : i32
    return %c0_i32, %c0_i32_0 : i32, i32
  }
  func.func @transform_5(%arg0: i32) -> (i32, i32) {
    %c0_i32 = arith.constant 0 : i32
    %c0_i32_0 = arith.constant 0 : i32
    %c0_i32_1 = arith.constant 0 : i32
    return %c0_i32, %c0_i32_0 : i32, i32
  }
  func.func @transform_6(%arg0: i32) -> (i32, i32) {
    %c0_i32 = arith.constant 0 : i32
    %c0_i32_0 = arith.constant 0 : i32
    %c0_i32_1 = arith.constant 0 : i32
    return %c0_i32, %c0_i32_0 : i32, i32
  }
  func.func @transform_7(%arg0: i32) -> (i32, i32) {
    %c0_i32 = arith.constant 0 : i32
    %c0_i32_0 = arith.constant 0 : i32
    return %arg0, %c0_i32 : i32, i32
  }
}

</mosaic_0001>

<llo_original>
// kernel: tpu_custom_call.1
$region0: #{tpu_custom_call.1}
  #allocation0 [shape = 'u32[]', space=smem, size = 0x4, offset = 0x4, fixed_abs, tag = 'smem constant byte address 0x4 - core index']
  #allocation1 [shape = 'u32[144,128]{1,0:T(1,128)}', space=vmem, size = 0x12000, scoped, tag = 'internal scratch']
  %s0 = inlined_call_operand.vmem [shape: f32[16,32], index: 0, kind: input, shape index: {}]
  %s1 = inlined_call_operand.hbm [shape: f32[32,64], index: 1, kind: input, shape index: {}]
  %s2 = inlined_call_operand.vmem [shape: f32[64,64], index: 2, kind: input, shape index: {}]
  %s3 = inlined_call_operand.vmem [shape: f32[64,16], index: 3, kind: input, shape index: {}]
  %s4 = inlined_call_operand.vmem [shape: f32[1,64], index: 4, kind: input, shape index: {}]
  %s5 = inlined_call_operand.vmem [shape: f32[1,64], index: 5, kind: input, shape index: {}]
  %s6 = inlined_call_operand.vmem [shape: f32[1,16], index: 6, kind: input, shape index: {}]
  %s7 = inlined_call_operand.hbm [shape: f32[16,16], index: 7, kind: output, shape index: {}]
  %s8 = sld [smem:[#allocation0]]
  $region65: #{tpu_custom_call.1} parent=0
    _
  %s10 = ssub.s32 1, %s8
  %s11 = scalar_select 0, %s10, %s8
  $region1: #{tpu_custom_call.1} parent=0
    #allocation2 [shape = 'u8[16384]{0}', space=vmem, size = 0x4000, scoped, tag = 'input window, operand 1, single buffered']
    #allocation3 [shape = 's32[2]{0}', space=sflag, size = 0x8, scoped, tag = 'scoped memory for tpu_custom_call.1']
    #allocation4 [shape = 's32[2]{0}', space=sflag, size = 0x8, scoped, tag = 'scoped memory for tpu_custom_call.1']
    #allocation5 [shape = 'u8[8192]{0}', space=vmem, size = 0x2000, scoped, tag = 'output window, operand 0']
    %12 = vsyncpa [#allocation3], 0
    %13 = vsyncpa [#allocation4], 0
    %s14 = scalar_lea.sflag [#allocation4], 1
    %15 = vsyncpa %s14, 0
    loop: start=0, step=1, limit=4
    $region2: #{tpu_custom_call.1} parent=1 // loop_pre_header
      _
    $region3: #{tpu_custom_call.1} parent=1 // loop_header
      %s17 = sphi 0, %s21
      %p18 = scmp.ge.s32.totalorder %s17, 4
      %s27 = sphi 0, %s29
      %s30 = sphi 0, %s27
      %s31 = sphi 0, %s30
      %s47 = sphi 0, %s31
      %s51 = sphi 0, %s51
      %s53 = sphi 0, %s51
      %s54 = sphi 0, %s53
      %s68 = sphi 0, %s54
      %s72 = sphi 0, %s72
      %s74 = sphi 0, %s72
      %s75 = sphi 0, %s74
      %s89 = sphi 0, %s75
      %s93 = sphi 0, %s93
      %s95 = sphi 0, %s93
      %s96 = sphi 0, %s95
      %s110 = sphi 0, %s96
      %s114 = sphi 0, %s114
      %s116 = sphi 0, %s114
      %s117 = sphi 0, %s116
      %s131 = sphi 0, %s117
      %s135 = sphi 0, %s135
      %s137 = sphi 0, %s135
      %s138 = sphi 0, %s137
      %s152 = sphi 0, %s138
      %s156 = sphi 0, %s156
      %s158 = sphi 0, %s156
      %s159 = sphi 0, %s158
      %s173 = sphi 0, %s159
      %s179 = sphi 0, %s181
      %s182 = sphi 0, %s179
      %s183 = sphi 0, %s182
      %s199 = sphi 0, %s183
    $region4: #{tpu_custom_call.1} parent=1 // loop_header_branch
      %20 = sbr.rel (%p18) target = $region8
    $region5: #{tpu_custom_call.1} parent=1 // loop_body
      %s22 = ssub.s32 %s17, 1
      %s23 = ssub.s32 %s17, 2
      %s24 = sadd.s32 %s17, 1
      %s25 = ssub.s32 %s17, %s24
      %p26 = scmp.eq.s32.totalorder %s25, 0
      %s28 = sadd.s32 %s27, 1
      %s29 = scalar_select %p26, %s27, %s28
      %p32 = pneg %p26
      %p33 = scmp.eq.s32.totalorder %s17, 1
      %p34 = por %p32, %p33
      %p35 = scmp.ne.s32.totalorder %s27, %s30
      %p36 = scmp.eq.s32.totalorder %s17, 0
      %p37 = por %p35, %p36
      %p38 = scmp.ne.s32.totalorder %s27, %s30
      %p39 = scmp.eq.s32.totalorder %s22, 1
      %p40 = por %p38, %p39
      %p41 = scmp.ne.s32.totalorder %s30, %s31
      %p42 = scmp.eq.s32.totalorder %s22, 0
      %p43 = por %p41, %p42
      %p44 = scmp.ne.s32.totalorder %s30, %s31
      %p45 = scmp.eq.s32.totalorder %s23, 1
      %p46 = por %p44, %p45
      %p48 = scmp.ne.s32.totalorder %s31, %s47
      %p49 = scmp.eq.s32.totalorder %s23, 0
      %p50 = por %p48, %p49
      %s52 = sadd.s32 %s51, 1
      %p55 = scmp.eq.s32.totalorder %s17, 1
      %p56 = scmp.ne.s32.totalorder %s51, %s53
      %p57 = scmp.eq.s32.totalorder %s17, 0
      %p58 = por %p56, %p57
      %p59 = scmp.ne.s32.totalorder %s51, %s53
      %p60 = scmp.eq.s32.totalorder %s22, 1
      %p61 = por %p59, %p60
      %p62 = scmp.ne.s32.totalorder %s53, %s54
      %p63 = scmp.eq.s32.totalorder %s22, 0
      %p64 = por %p62, %p63
      %p65 = scmp.ne.s32.totalorder %s53, %s54
      %p66 = scmp.eq.s32.totalorder %s23, 1
      %p67 = por %p65, %p66
      %p69 = scmp.ne.s32.totalorder %s54, %s68
      %p70 = scmp.eq.s32.totalorder %s23, 0
      %p71 = por %p69, %p70
      %s73 = sadd.s32 %s72, 1
      %p76 = scmp.eq.s32.totalorder %s17, 1
      %p77 = scmp.ne.s32.totalorder %s72, %s74
      %p78 = scmp.eq.s32.totalorder %s17, 0
      %p79 = por %p77, %p78
      %p80 = scmp.ne.s32.totalorder %s72, %s74
      %p81 = scmp.eq.s32.totalorder %s22, 1
      %p82 = por %p80, %p81
      %p83 = scmp.ne.s32.totalorder %s74, %s75
      %p84 = scmp.eq.s32.totalorder %s22, 0
      %p85 = por %p83, %p84
      %p86 = scmp.ne.s32.totalorder %s74, %s75
      %p87 = scmp.eq.s32.totalorder %s23, 1
      %p88 = por %p86, %p87
      %p90 = scmp.ne.s32.totalorder %s75, %s89
      %p91 = scmp.eq.s32.totalorder %s23, 0
      %p92 = por %p90, %p91
      %s94 = sadd.s32 %s93, 1
      %p97 = scmp.eq.s32.totalorder %s17, 1
      %p98 = scmp.ne.s32.totalorder %s93, %s95
      %p99 = scmp.eq.s32.totalorder %s17, 0
      %p100 = por %p98, %p99
      %p101 = scmp.ne.s32.totalorder %s93, %s95
      %p102 = scmp.eq.s32.totalorder %s22, 1
      %p103 = por %p101, %p102
      %p104 = scmp.ne.s32.totalorder %s95, %s96
      %p105 = scmp.eq.s32.totalorder %s22, 0
      %p106 = por %p104, %p105
      %p107 = scmp.ne.s32.totalorder %s95, %s96
      %p108 = scmp.eq.s32.totalorder %s23, 1
      %p109 = por %p107, %p108
      %p111 = scmp.ne.s32.totalorder %s96, %s110
      %p112 = scmp.eq.s32.totalorder %s23, 0
      %p113 = por %p111, %p112
      %s115 = sadd.s32 %s114, 1
      %p118 = scmp.eq.s32.totalorder %s17, 1
      %p119 = scmp.ne.s32.totalorder %s114, %s116
      %p120 = scmp.eq.s32.totalorder %s17, 0
      %p121 = por %p119, %p120
      %p122 = scmp.ne.s32.totalorder %s114, %s116
      %p123 = scmp.eq.s32.totalorder %s22, 1
      %p124 = por %p122, %p123
      %p125 = scmp.ne.s32.totalorder %s116, %s117
      %p126 = scmp.eq.s32.totalorder %s22, 0
      %p127 = por %p125, %p126
      %p128 = scmp.ne.s32.totalorder %s116, %s117
      %p129 = scmp.eq.s32.totalorder %s23, 1
      %p130 = por %p128, %p129
      %p132 = scmp.ne.s32.totalorder %s117, %s131
      %p133 = scmp.eq.s32.totalorder %s23, 0
      %p134 = por %p132, %p133
      %s136 = sadd.s32 %s135, 1
      %p139 = scmp.eq.s32.totalorder %s17, 1
      %p140 = scmp.ne.s32.totalorder %s135, %s137
      %p141 = scmp.eq.s32.totalorder %s17, 0
      %p142 = por %p140, %p141
      %p143 = scmp.ne.s32.totalorder %s135, %s137
      %p144 = scmp.eq.s32.totalorder %s22, 1
      %p145 = por %p143, %p144
      %p146 = scmp.ne.s32.totalorder %s137, %s138
      %p147 = scmp.eq.s32.totalorder %s22, 0
      %p148 = por %p146, %p147
      %p149 = scmp.ne.s32.totalorder %s137, %s138
      %p150 = scmp.eq.s32.totalorder %s23, 1
      %p151 = por %p149, %p150
      %p153 = scmp.ne.s32.totalorder %s138, %s152
      %p154 = scmp.eq.s32.totalorder %s23, 0
      %p155 = por %p153, %p154
      %s157 = sadd.s32 %s156, 1
      %p160 = scmp.eq.s32.totalorder %s17, 1
      %p161 = scmp.ne.s32.totalorder %s156, %s158
      %p162 = scmp.eq.s32.totalorder %s17, 0
      %p163 = por %p161, %p162
      %p164 = scmp.ne.s32.totalorder %s156, %s158
      %p165 = scmp.eq.s32.totalorder %s22, 1
      %p166 = por %p164, %p165
      %p167 = scmp.ne.s32.totalorder %s158, %s159
      %p168 = scmp.eq.s32.totalorder %s22, 0
      %p169 = por %p167, %p168
      %p170 = scmp.ne.s32.totalorder %s158, %s159
      %p171 = scmp.eq.s32.totalorder %s23, 1
      %p172 = por %p170, %p171
      %p174 = scmp.ne.s32.totalorder %s159, %s173
      %p175 = scmp.eq.s32.totalorder %s23, 0
      %p176 = por %p174, %p175
      %s177 = ssub.s32 %s17, %s24
      %p178 = scmp.eq.s32.totalorder %s177, 0
      %s180 = sadd.s32 %s179, 1
      %s181 = scalar_select %p178, %s179, %s180
      %p184 = pneg %p178
      %p185 = scmp.eq.s32.totalorder %s17, 1
      %p186 = por %p184, %p185
      %p187 = scmp.ne.s32.totalorder %s179, %s182
      %p188 = scmp.eq.s32.totalorder %s17, 0
      %p189 = por %p187, %p188
      %p190 = scmp.ne.s32.totalorder %s179, %s182
      %p191 = scmp.eq.s32.totalorder %s22, 1
      %p192 = por %p190, %p191
      %p193 = scmp.ne.s32.totalorder %s182, %s183
      %p194 = scmp.eq.s32.totalorder %s22, 0
      %p195 = por %p193, %p194
      %p196 = scmp.ne.s32.totalorder %s182, %s183
      %p197 = scmp.eq.s32.totalorder %s23, 1
      %p198 = por %p196, %p197
      %p200 = scmp.ne.s32.totalorder %s183, %s199
      %p201 = scmp.eq.s32.totalorder %s23, 0
      %p202 = por %p200, %p201
      %p203 = scmp.le.s32.totalorder 1, %s17
      %p204 = scmp.lt.s32.totalorder %s17, 3
      %p205 = pnand %p203, %p204
      %p206 = pneg %p205
      // Predicated region
      $region9: #{tpu_custom_call.1} parent=5 // pred_check
        _
      $region10: #{tpu_custom_call.1} parent=5 // pred_check_branch
        %208 = sbr.rel (%p205) target = $region12
      $region11: #{tpu_custom_call.1} parent=5 // pred_region
        %s209 = ssub.s32 %s17, 1
        // Predicated region
        $region13: #{tpu_custom_call.1} parent=11 // pred_check
          %p210 = pneg %p64
        $region14: #{tpu_custom_call.1} parent=11 // pred_check_branch
          %212 = sbr.rel (%p210) target = $region16
        $region15: #{tpu_custom_call.1} parent=11 // pred_region
          %s214 = ssub.s32 512, 512
          %215 = vsyncadd [#allocation3], %s214
          %s216 = sshll.u32 [#allocation2], 4
          %s217 = int_to_ptr.vmem [resolvable:$true] %s216
          %222 = dma.hbm_to_vmem [thread:$0]  %s1, 512, %s217, [#allocation3], 128, 128, 8
        $region16: #{tpu_custom_call.1} parent=11 // pred_fallthru
          _
        // Predicated region
        $region17: #{tpu_custom_call.1} parent=11 // pred_check
          %p223 = pneg %p85
        $region18: #{tpu_custom_call.1} parent=11 // pred_check_branch
          %225 = sbr.rel (%p223) target = $region20
        $region19: #{tpu_custom_call.1} parent=11 // pred_region
          _
        $region20: #{tpu_custom_call.1} parent=11 // pred_fallthru
          _
        // Predicated region
        $region21: #{tpu_custom_call.1} parent=11 // pred_check
          %p226 = pneg %p106
        $region22: #{tpu_custom_call.1} parent=11 // pred_check_branch
          %228 = sbr.rel (%p226) target = $region24
        $region23: #{tpu_custom_call.1} parent=11 // pred_region
          _
        $region24: #{tpu_custom_call.1} parent=11 // pred_fallthru
          _
        // Predicated region
        $region25: #{tpu_custom_call.1} parent=11 // pred_check
          %p229 = pneg %p127
        $region26: #{tpu_custom_call.1} parent=11 // pred_check_branch
          %231 = sbr.rel (%p229) target = $region28
        $region27: #{tpu_custom_call.1} parent=11 // pred_region
          _
        $region28: #{tpu_custom_call.1} parent=11 // pred_fallthru
          _
        // Predicated region
        $region29: #{tpu_custom_call.1} parent=11 // pred_check
          %p232 = pneg %p148
        $region30: #{tpu_custom_call.1} parent=11 // pred_check_branch
          %234 = sbr.rel (%p232) target = $region32
        $region31: #{tpu_custom_call.1} parent=11 // pred_region
          _
        $region32: #{tpu_custom_call.1} parent=11 // pred_fallthru
          _
        // Predicated region
        $region33: #{tpu_custom_call.1} parent=11 // pred_check
          %p235 = pneg %p169
        $region34: #{tpu_custom_call.1} parent=11 // pred_check_branch
          %237 = sbr.rel (%p235) target = $region36
        $region35: #{tpu_custom_call.1} parent=11 // pred_region
          _
        $region36: #{tpu_custom_call.1} parent=11 // pred_fallthru
          _
      $region12: #{tpu_custom_call.1} parent=5 // pred_fallthru
        _
      %p238 = scmp.lt.s32.totalorder %s17, 2
      // Predicated region
      $region37: #{tpu_custom_call.1} parent=5 // pred_check
        %p239 = pneg %p238
      $region38: #{tpu_custom_call.1} parent=5 // pred_check_branch
        %241 = sbr.rel (%p239) target = $region40
      $region39: #{tpu_custom_call.1} parent=5 // pred_region
        // Predicated region
        $region41: #{tpu_custom_call.1} parent=39 // pred_check
          %p242 = pneg %p37
        $region42: #{tpu_custom_call.1} parent=39 // pred_check_branch
          %244 = sbr.rel (%p242) target = $region44
        $region43: #{tpu_custom_call.1} parent=39 // pred_region
          %p245 = scmp.lt.s32.totalorder %s17, 1
          %s246 = scalar_select %p245, %s17, 1
          %s247 = smul.addr %s246, 8
          %s248 = scalar_lea.vmem %s0, %s247
        $region44: #{tpu_custom_call.1} parent=39 // pred_fallthru
          _
      $region40: #{tpu_custom_call.1} parent=5 // pred_fallthru
        _
      %p249 = scmp.le.s32.totalorder 1, %s17
      %p250 = scmp.lt.s32.totalorder %s17, 3
      %p251 = pnand %p249, %p250
      %p252 = pneg %p251
      // Predicated region
      $region45: #{tpu_custom_call.1} parent=5 // pred_check
        _
      $region46: #{tpu_custom_call.1} parent=5 // pred_check_branch
        %254 = sbr.rel (%p251) target = $region48
      $region47: #{tpu_custom_call.1} parent=5 // pred_region
        %s255 = ssub.s32 %s17, 1
        // Predicated region
        $region49: #{tpu_custom_call.1} parent=47 // pred_check
          %p256 = pneg %p64
        $region50: #{tpu_custom_call.1} parent=47 // pred_check_branch
          %258 = sbr.rel (%p256) target = $region52
        $region51: #{tpu_custom_call.1} parent=47 // pred_region
          %259 = dma.done [#allocation3], 512
        $region52: #{tpu_custom_call.1} parent=47 // pred_fallthru
          _
        %p260 = scmp.lt.s32.totalorder %s22, 1
        %s261 = scalar_select %p260, %s22, 1
        %s262 = smul.addr %s261, 8
        %s263 = scalar_lea.vmem %s0, %s262
        %p264 = pneg %p43
        %p265 = pneg %p40
        %p266 = pneg %p64
        %p267 = pneg %p61
        %p268 = pneg %p85
        %p269 = pneg %p82
        %p270 = pneg %p106
        %p271 = pneg %p103
        %p272 = pneg %p127
        %p273 = pneg %p124
        %p274 = pneg %p148
        %p275 = pneg %p145
        %p276 = pneg %p169
        %p277 = pneg %p166
        %p278 = pneg %p195
        %p279 = pneg %p192
        %s280 = sand.u32 %s182, 1
        %s281 = scalar_lea.sflag [#allocation4], %s280
        %s282 = sand.u32 %s182, 1
        %s283 = smul.addr %s282, 8
        %s284 = scalar_lea.vmem [#allocation5], %s283
        %p285 = scmp.lt.s32.totalorder %s22, 1
        %s286 = scalar_select %p285, %s22, 1
        %s287 = smul.addr %s286, 8
        %s288 = scalar_lea.vmem %s0, %s287
        %v289 = vld [vmem:[%s288] sm:$0xff]
        %v290 = vld [vmem:[#allocation2] sm:$0xff]
        %v291 = vld [vmem:[#allocation2 + $0x8] sm:$0xff]
        %v292 = vld [vmem:[#allocation2 + $0x10] sm:$0xff]
        %v293 = vld [vmem:[#allocation2 + $0x18] sm:$0xff]
        %v294 = vld [vmem:[%s4] sm:$0x1]
        %v296 = vlaneseq
        %v297 = vshrl.u32 %v296, 7
        %v298 = vsub.s32 0, %v297
        %v299 = vrot.slane %v294, %v298
        %vm301 = vcmask 261120
        %v303 = vsel %vm301, %v289, 0
        %305 = vmatprep.subr.mxu0 0.0
        %306 = vmatpush1.msra.mxu0 %v290
        %307 = vmatprep.subr.mxu0 0.0
        %308 = vmatpush1.msra.mxu0 %v291
        %309 = vmatprep.subr.mxu0 0.0
        %310 = vmatpush1.msra.mxu0 %v292
        %311 = vmatprep.subr.mxu0 0.0
        %312 = vmatpush1.msra.mxu0 %v293
        %313 = vmatprep.subr.mxu0 0.0
        %314 = vmatpush1.msra.mxu0 0.0
        %315 = vmatprep.subr.mxu0 0.0
        %316 = vmatpush1.msra.mxu0 0.0
        %317 = vmatprep.subr.mxu0 0.0
        %318 = vmatpush1.msra.mxu0 0.0
        %319 = vmatprep.subr.mxu0 0.0
        %320 = vmatpush1.msra.mxu0 0.0
        %321 = vmatprep.subr.mxu0 0.0
        %322 = vmatpush1.msra.mxu0 0.0
        %323 = vmatprep.subr.mxu0 0.0
        %324 = vmatpush1.msra.mxu0 0.0
        %325 = vmatprep.subr.mxu0 0.0
        %326 = vmatpush1.msra.mxu0 0.0
        %327 = vmatprep.subr.mxu0 0.0
        %328 = vmatpush1.msra.mxu0 0.0
        %329 = vmatprep.subr.mxu0 0.0
        %330 = vmatpush1.msra.mxu0 0.0
        %331 = vmatprep.subr.mxu0 0.0
        %332 = vmatpush1.msra.mxu0 0.0
        %333 = vmatprep.subr.mxu0 0.0
        %334 = vmatpush1.msra.mxu0 0.0
        %335 = vmatprep.subr.mxu0 0.0
        %336 = vmatpush1.msra.mxu0 0.0
        %337 = vmatprep.subr.mxu0 0.0
        %338 = vmatpush1.msra.mxu0 0.0
        %339 = vmatprep.subr.mxu0 0.0
        %340 = vmatpush1.msra.mxu0 0.0
        %341 = vmatprep.subr.mxu0 0.0
        %342 = vmatpush1.msra.mxu0 0.0
        %343 = vmatprep.subr.mxu0 0.0
        %344 = vmatpush1.msra.mxu0 0.0
        %345 = vmatprep.subr.mxu0 0.0
        %346 = vmatpush1.msra.mxu0 0.0
        %347 = vmatprep.subr.mxu0 0.0
        %348 = vmatpush1.msra.mxu0 0.0
        %349 = vmatprep.subr.mxu0 0.0
        %350 = vmatpush1.msra.mxu0 0.0
        %351 = vmatprep.subr.mxu0 0.0
        %352 = vmatpush1.msra.mxu0 0.0
        %353 = vmatprep.subr.mxu0 0.0
        %354 = vmatpush1.msra.mxu0 0.0
        %355 = vmatprep.subr.mxu0 0.0
        %356 = vmatpush1.msra.mxu0 0.0
        %357 = vmatprep.subr.mxu0 0.0
        %358 = vmatpush1.msra.mxu0 0.0
        %359 = vmatprep.subr.mxu0 0.0
        %360 = vmatpush1.msra.mxu0 0.0
        %361 = vmatprep.subr.mxu0 0.0
        %362 = vmatpush1.msra.mxu0 0.0
        %363 = vmatprep.subr.mxu0 0.0
        %364 = vmatpush1.msra.mxu0 0.0
        %365 = vmatprep.subr.mxu0 0.0
        %366 = vmatpush1.msra.mxu0 0.0
        %367 = vmatprep.subr.mxu0 0.0
        %368 = vmatpush1.msra.mxu0 0.0
        %369 = vmatprep.mubr.f32.mxu0 0.0
        %370 = vmatmul.mubr.f32.gmra.mrb[0].mxu0 %v303
        %v371 = vpop.f32.mrb[0].mxu0
        %v372 = vadd.f32 %v299, %v371
        %v373 = vpop.f32.mrb[0].mxu0
        %374 = vdwg.mxu0
        %v375 = vmax.f32 %v372, 0.0
        %v376 = vld [vmem:[%s2] sm:$0xff]
        %v377 = vld [vmem:[%s2 + $0x8] sm:$0xff]
        %v378 = vld [vmem:[%s2 + $0x10] sm:$0xff]
        %v379 = vld [vmem:[%s2 + $0x18] sm:$0xff]
        %v380 = vld [vmem:[%s2 + $0x20] sm:$0xff]
        %v381 = vld [vmem:[%s2 + $0x28] sm:$0xff]
        %v382 = vld [vmem:[%s2 + $0x30] sm:$0xff]
        %v383 = vld [vmem:[%s2 + $0x38] sm:$0xff]
        %v384 = vld [vmem:[%s5] sm:$0x1]
        %v386 = vlaneseq
        %v387 = vshrl.u32 %v386, 7
        %v388 = vsub.s32 0, %v387
        %v389 = vrot.slane %v384, %v388
        %vm391 = vcmask 523264
        %v393 = vsel %vm391, %v375, 0
        %395 = vmatprep.subr.mxu0 0.0
        %396 = vmatpush1.msra.mxu0 %v376
        %397 = vmatprep.subr.mxu0 0.0
        %398 = vmatpush1.msra.mxu0 %v377
        %399 = vmatprep.subr.mxu0 0.0
        %400 = vmatpush1.msra.mxu0 %v378
        %401 = vmatprep.subr.mxu0 0.0
        %402 = vmatpush1.msra.mxu0 %v379
        %403 = vmatprep.subr.mxu0 0.0
        %404 = vmatpush1.msra.mxu0 %v380
        %405 = vmatprep.subr.mxu0 0.0
        %406 = vmatpush1.msra.mxu0 %v381
        %407 = vmatprep.subr.mxu0 0.0
        %408 = vmatpush1.msra.mxu0 %v382
        %409 = vmatprep.subr.mxu0 0.0
        %410 = vmatpush1.msra.mxu0 %v383
        %411 = vmatprep.subr.mxu0 0.0
        %412 = vmatpush1.msra.mxu0 0.0
        %413 = vmatprep.subr.mxu0 0.0
        %414 = vmatpush1.msra.mxu0 0.0
        %415 = vmatprep.subr.mxu0 0.0
        %416 = vmatpush1.msra.mxu0 0.0
        %417 = vmatprep.subr.mxu0 0.0
        %418 = vmatpush1.msra.mxu0 0.0
        %419 = vmatprep.subr.mxu0 0.0
        %420 = vmatpush1.msra.mxu0 0.0
        %421 = vmatprep.subr.mxu0 0.0
        %422 = vmatpush1.msra.mxu0 0.0
        %423 = vmatprep.subr.mxu0 0.0
        %424 = vmatpush1.msra.mxu0 0.0
        %425 = vmatprep.subr.mxu0 0.0
        %426 = vmatpush1.msra.mxu0 0.0
        %427 = vmatprep.subr.mxu0 0.0
        %428 = vmatpush1.msra.mxu0 0.0
        %429 = vmatprep.subr.mxu0 0.0
        %430 = vmatpush1.msra.mxu0 0.0
        %431 = vmatprep.subr.mxu0 0.0
        %432 = vmatpush1.msra.mxu0 0.0
        %433 = vmatprep.subr.mxu0 0.0
        %434 = vmatpush1.msra.mxu0 0.0
        %435 = vmatprep.subr.mxu0 0.0
        %436 = vmatpush1.msra.mxu0 0.0
        %437 = vmatprep.subr.mxu0 0.0
        %438 = vmatpush1.msra.mxu0 0.0
        %439 = vmatprep.subr.mxu0 0.0
        %440 = vmatpush1.msra.mxu0 0.0
        %441 = vmatprep.subr.mxu0 0.0
        %442 = vmatpush1.msra.mxu0 0.0
        %443 = vmatprep.subr.mxu0 0.0
        %444 = vmatpush1.msra.mxu0 0.0
        %445 = vmatprep.subr.mxu0 0.0
        %446 = vmatpush1.msra.mxu0 0.0
        %447 = vmatprep.subr.mxu0 0.0
        %448 = vmatpush1.msra.mxu0 0.0
        %449 = vmatprep.subr.mxu0 0.0
        %450 = vmatpush1.msra.mxu0 0.0
        %451 = vmatprep.subr.mxu0 0.0
        %452 = vmatpush1.msra.mxu0 0.0
        %453 = vmatprep.subr.mxu0 0.0
        %454 = vmatpush1.msra.mxu0 0.0
        %455 = vmatprep.subr.mxu0 0.0
        %456 = vmatpush1.msra.mxu0 0.0
        %457 = vmatprep.subr.mxu0 0.0
        %458 = vmatpush1.msra.mxu0 0.0
        %459 = vmatprep.mubr.f32.mxu0 0.0
        %460 = vmatmul.mubr.f32.gmra.mrb[0].mxu0 %v393
        %v461 = vpop.f32.mrb[0].mxu0
        %v462 = vadd.f32 %v389, %v461
        %v463 = vpop.f32.mrb[0].mxu0
        %464 = vdwg.mxu0
        %v465 = vmax.f32 %v462, 0.0
        %v466 = vld [vmem:[%s3] sm:$0xff]
        %v467 = vld [vmem:[%s3 + $0x8] sm:$0xff]
        %v468 = vld [vmem:[%s3 + $0x10] sm:$0xff]
        %v469 = vld [vmem:[%s3 + $0x18] sm:$0xff]
        %v470 = vld [vmem:[%s3 + $0x20] sm:$0xff]
        %v471 = vld [vmem:[%s3 + $0x28] sm:$0xff]
        %v472 = vld [vmem:[%s3 + $0x30] sm:$0xff]
        %v473 = vld [vmem:[%s3 + $0x38] sm:$0xff]
        %v474 = vld [vmem:[%s6] sm:$0x1]
        %v476 = vlaneseq
        %v477 = vshrl.u32 %v476, 7
        %v478 = vsub.s32 0, %v477
        %v479 = vrot.slane %v474, %v478
        %v482 = vsel %vm391, %v465, 0
        %484 = vmatprep.subr.mxu0 0.0
        %485 = vmatpush1.msra.mxu0 %v466
        %486 = vmatprep.subr.mxu0 0.0
        %487 = vmatpush1.msra.mxu0 %v467
        %488 = vmatprep.subr.mxu0 0.0
        %489 = vmatpush1.msra.mxu0 %v468
        %490 = vmatprep.subr.mxu0 0.0
        %491 = vmatpush1.msra.mxu0 %v469
        %492 = vmatprep.subr.mxu0 0.0
        %493 = vmatpush1.msra.mxu0 %v470
        %494 = vmatprep.subr.mxu0 0.0
        %495 = vmatpush1.msra.mxu0 %v471
        %496 = vmatprep.subr.mxu0 0.0
        %497 = vmatpush1.msra.mxu0 %v472
        %498 = vmatprep.subr.mxu0 0.0
        %499 = vmatpush1.msra.mxu0 %v473
        %500 = vmatprep.subr.mxu0 0.0
        %501 = vmatpush1.msra.mxu0 0.0
        %502 = vmatprep.subr.mxu0 0.0
        %503 = vmatpush1.msra.mxu0 0.0
        %504 = vmatprep.subr.mxu0 0.0
        %505 = vmatpush1.msra.mxu0 0.0
        %506 = vmatprep.subr.mxu0 0.0
        %507 = vmatpush1.msra.mxu0 0.0
        %508 = vmatprep.subr.mxu0 0.0
        %509 = vmatpush1.msra.mxu0 0.0
        %510 = vmatprep.subr.mxu0 0.0
        %511 = vmatpush1.msra.mxu0 0.0
        %512 = vmatprep.subr.mxu0 0.0
        %513 = vmatpush1.msra.mxu0 0.0
        %514 = vmatprep.subr.mxu0 0.0
        %515 = vmatpush1.msra.mxu0 0.0
        %516 = vmatprep.subr.mxu0 0.0
        %517 = vmatpush1.msra.mxu0 0.0
        %518 = vmatprep.subr.mxu0 0.0
        %519 = vmatpush1.msra.mxu0 0.0
        %520 = vmatprep.subr.mxu0 0.0
        %521 = vmatpush1.msra.mxu0 0.0
        %522 = vmatprep.subr.mxu0 0.0
        %523 = vmatpush1.msra.mxu0 0.0
        %524 = vmatprep.subr.mxu0 0.0
        %525 = vmatpush1.msra.mxu0 0.0
        %526 = vmatprep.subr.mxu0 0.0
        %527 = vmatpush1.msra.mxu0 0.0
        %528 = vmatprep.subr.mxu0 0.0
        %529 = vmatpush1.msra.mxu0 0.0
        %530 = vmatprep.subr.mxu0 0.0
        %531 = vmatpush1.msra.mxu0 0.0
        %532 = vmatprep.subr.mxu0 0.0
        %533 = vmatpush1.msra.mxu0 0.0
        %534 = vmatprep.subr.mxu0 0.0
        %535 = vmatpush1.msra.mxu0 0.0
        %536 = vmatprep.subr.mxu0 0.0
        %537 = vmatpush1.msra.mxu0 0.0
        %538 = vmatprep.subr.mxu0 0.0
        %539 = vmatpush1.msra.mxu0 0.0
        %540 = vmatprep.subr.mxu0 0.0
        %541 = vmatpush1.msra.mxu0 0.0
        %542 = vmatprep.subr.mxu0 0.0
        %543 = vmatpush1.msra.mxu0 0.0
        %544 = vmatprep.subr.mxu0 0.0
        %545 = vmatpush1.msra.mxu0 0.0
        %546 = vmatprep.subr.mxu0 0.0
        %547 = vmatpush1.msra.mxu0 0.0
        %548 = vmatprep.mubr.f32.mxu0 0.0
        %549 = vmatmul.mubr.f32.gmra.mrb[0].mxu0 %v482
        %v550 = vpop.f32.mrb[0].mxu0
        %v551 = vadd.f32 %v479, %v550
        %v552 = vpop.f32.mrb[0].mxu0
        %553 = vdwg.mxu0
        %vm554 = vcmask 130048
        %555 = vst.msk [vmem:[%s284] sm:$0xff] %vm554, %v551
        %s556 = sand.u32 %s182, 1
        %s557 = scalar_lea.sflag [#allocation4], %s556
        %s558 = sand.u32 %s182, 1
        %s559 = smul.addr %s558, 8
        %s560 = scalar_lea.vmem [#allocation5], %s559
        // Predicated region
        $region53: #{tpu_custom_call.1} parent=47 // pred_check
          %p561 = pneg %p192
        $region54: #{tpu_custom_call.1} parent=47 // pred_check_branch
          %563 = sbr.rel (%p561) target = $region56
        $region55: #{tpu_custom_call.1} parent=47 // pred_region
          %s565 = ssub.s32 128, 128
          %566 = vsyncadd %s557, %s565
          %s567 = smul.addr %s22, 128
          %s568 = scalar_lea.hbm %s7, %s567
          %s570 = sshll.u32 %s560, 4
          %s571 = int_to_ptr.vmem [resolvable:$true] %s570
          %573 = dma.vmem_to_hbm [thread:$0]  %s571, 128, %s568, %s557
        $region56: #{tpu_custom_call.1} parent=47 // pred_fallthru
          _
      $region48: #{tpu_custom_call.1} parent=5 // pred_fallthru
        _
      %p574 = scmp.le.s32.totalorder 2, %s17
      // Predicated region
      $region57: #{tpu_custom_call.1} parent=5 // pred_check
        %p575 = pneg %p574
      $region58: #{tpu_custom_call.1} parent=5 // pred_check_branch
        %577 = sbr.rel (%p575) target = $region60
      $region59: #{tpu_custom_call.1} parent=5 // pred_region
        %s578 = ssub.s32 %s17, 2
        // Predicated region
        $region61: #{tpu_custom_call.1} parent=59 // pred_check
          %p579 = pneg %p198
        $region62: #{tpu_custom_call.1} parent=59 // pred_check_branch
          %581 = sbr.rel (%p579) target = $region64
        $region63: #{tpu_custom_call.1} parent=59 // pred_region
          %s582 = sand.u32 %s183, 1
          %s583 = scalar_lea.sflag [#allocation4], %s582
          %s584 = sand.u32 %s183, 1
          %s585 = smul.addr %s584, 8
          %s586 = scalar_lea.vmem [#allocation5], %s585
          %587 = dma.done %s583, 128
        $region64: #{tpu_custom_call.1} parent=59 // pred_fallthru
          _
      $region60: #{tpu_custom_call.1} parent=5 // pred_fallthru
        _
    $region6: #{tpu_custom_call.1} parent=1 // loop_footer
      %s21 = sadd.s32 1, %s17
    $region7: #{tpu_custom_call.1} parent=1 // loop_footer_branch
      %16 = sbr.rel target = $region3
    $region8: #{tpu_custom_call.1} parent=1 // loop_exit
      _
    %588 = vsyncpa [#allocation3], 1
    %s589 = scalar_lea.sflag [#allocation3], 1
    %590 = vsyncpa %s589, 1
    %591 = vsyncpa [#allocation4], 1
    %s592 = scalar_lea.sflag [#allocation4], 1
    %593 = vsyncpa %s592, 1

</llo_original>
